<compile_context>
chip_gen: v5e
topology: v5e:2x2
jax: 0.10.0
libtpu: 0.0.40
codegen_flags: <defaults>
</compile_context>

<pallas_src>
import jax
import jax.numpy as jnp
from jax.experimental import pallas as pl
from jax.experimental.pallas import tpu as pltpu


def _policy_kernel(x_ref, w_ref, b_ref, mu_ref, ls_ref):
    # One MXU matmul per batch tile; f32 accumulate; bias broadcast over rows.
    y = jnp.dot(x_ref[...], w_ref[...], preferred_element_type=jnp.float32)
    y = y + b_ref[...]
    # chunk(2, dim=-1): split at nu INSIDE the kernel (two lane-sliced stores),
    # avoiding a second HBM pass over the packed y in the wrapper.
    nu = mu_ref.shape[-1]
    mu_ref[...] = y[:, :nu].astype(mu_ref.dtype)
    ls_ref[...] = y[:, nu:].astype(ls_ref.dtype)


def dummy_policy_forward(x, w, b, *, tb=4096, xla_fallback_max_batch=512):
    """x: (B, nx), w: (nx, 2*nu), b: (2*nu,) -> (mu, log_std_raw), each (B, nu).

    Semantics match torch: y = x @ w + b; mu, log_std_raw = y.chunk(2, dim=-1).

    tb: batch tile for the grid path.  Sweep per generation:
        v5e ~2048-4096, v6e ~4096, v7x 8192-16384 (prefer an even step count so
        the "parallel" batch axis actually feeds both TensorCores).
    xla_fallback_max_batch: for B at or below this, a single fused XLA dot is
        strictly faster than a one-step pallas_call; set to 0 to force Pallas.
    """
    B, nx = x.shape
    two_nu = w.shape[1]
    nu = two_nu // 2

    # Tiny-batch fast path: let XLA fuse it with surrounding ops.
    if B <= xla_fallback_max_batch:
        y = x @ w + b
        return y[:, :nu], y[:, nu:]

    b2d = b.reshape(1, two_nu).astype(x.dtype)

    if B <= tb:
        # Single full-array tile (full-dims escape hatch for the (8,128) rule).
        tile_b = B
    else:
        # Multi-step grid over the batch.  tile_b must be a multiple of the
        # 8-sublane quantum; the boundary block (when tb does not divide B) is
        # handled by Pallas' partial-block masking — no pad / trim copies.
        tile_b = (tb // 8) * 8

    grid = (pl.cdiv(B, tile_b),)

    cost = pl.CostEstimate(
        flops=2 * B * nx * two_nu,
        transcendentals=0,
        bytes_accessed=x.dtype.itemsize * (B * (nx + two_nu) + nx * two_nu + two_nu),
    )

    mu, log_std_raw = pl.pallas_call(
        _policy_kernel,
        out_shape=(
            jax.ShapeDtypeStruct((B, nu), x.dtype),
            jax.ShapeDtypeStruct((B, nu), x.dtype),
        ),
        grid=grid,
        in_specs=[
            pl.BlockSpec((tile_b, nx), lambda i: (i, 0)),      # x: tiled over batch
            pl.BlockSpec((nx, two_nu), lambda i: (0, 0)),      # w: resident in VMEM
            pl.BlockSpec((1, two_nu), lambda i: (0, 0)),       # b: resident in VMEM
        ],
        out_specs=[
            pl.BlockSpec((tile_b, nu), lambda i: (i, 0)),      # mu
            pl.BlockSpec((tile_b, nu), lambda i: (i, 0)),      # log_std_raw
        ],
        compiler_params=pltpu.CompilerParams(
            dimension_semantics=("parallel",),                 # shard batch across TCs on v7x
        ),
        cost_estimate=cost,
    )(x, w, b2d)

    return mu, log_std_raw


def _reference(x, w, b):
    y = x @ w + b
    nu = w.shape[1] // 2
    return y[:, :nu], y[:, nu:]


if __name__ == "__main__":
    nx, nu = 32, 16

    key = jax.random.PRNGKey(0)
    kx, kw, kb, kx2 = jax.random.split(key, 4)

    # Deterministic param init mimicking nn.Linear default: U(-1/sqrt(nx), 1/sqrt(nx)).
    bound = 1.0 / (nx ** 0.5)
    w = jax.random.uniform(kw, (nx, 2 * nu), jnp.float32, -bound, bound)
    b = jax.random.uniform(kb, (2 * nu,), jnp.float32, -bound, bound)

    # 1) Small batch forced through the Pallas kernel (single full-array tile, grid=(1,)).
    B = 8
    x = jax.random.normal(kx, (B, nx), jnp.float32)
    mu, log_std_raw = dummy_policy_forward(x, w, b, xla_fallback_max_batch=0)
    jax.block_until_ready((mu, log_std_raw))
    mu_ref, ls_ref = _reference(x, w, b)
    assert mu.shape == (B, nu) and log_std_raw.shape == (B, nu)
    assert jnp.allclose(mu, mu_ref, atol=1e-5), "mu mismatch (small batch, pallas)"
    assert jnp.allclose(log_std_raw, ls_ref, atol=1e-5), "log_std_raw mismatch (small batch, pallas)"

    # 2) Multi-step grid path with a partial boundary block (B2 = 4*256 + 32),
    #    no padding and no output trim.
    B2 = 1056
    x2 = jax.random.normal(kx2, (B2, nx), jnp.float32)
    mu2, ls2 = dummy_policy_forward(x2, w, b, tb=256, xla_fallback_max_batch=0)
    jax.block_until_ready((mu2, ls2))
    mu2_ref, ls2_ref = _reference(x2, w, b)
    assert mu2.shape == (B2, nu) and ls2.shape == (B2, nu)
    assert jnp.allclose(mu2, mu2_ref, atol=1e-5), "mu mismatch (batched grid)"
    assert jnp.allclose(ls2, ls2_ref, atol=1e-5), "log_std_raw mismatch (batched grid)"

    # 3) Default small-batch XLA fallback path (same semantics, no pallas launch).
    mu3, ls3 = dummy_policy_forward(x, w, b)
    jax.block_until_ready((mu3, ls3))
    assert jnp.allclose(mu3, mu_ref, atol=1e-5), "mu mismatch (xla fallback)"
    assert jnp.allclose(ls3, ls_ref, atol=1e-5), "log_std_raw mismatch (xla fallback)"

    print("KERNEL_OK")
</pallas_src>

<mosaic_0001>
module attributes {stable_mosaic.version = 11 : i64} {
  func.func @_policy_kernel(%arg0: i32, %arg1: memref<8x32xf32, #tpu.memory_space<vmem>>, %arg2: memref<32x32xf32, #tpu.memory_space<vmem>>, %arg3: memref<1x32xf32, #tpu.memory_space<vmem>>, %arg4: memref<8x16xf32, #tpu.memory_space<vmem>>, %arg5: memref<8x16xf32, #tpu.memory_space<vmem>>) attributes {dimension_semantics = [#tpu.dimension_semantics<parallel>], iteration_bounds = array<i64: 1>, scalar_prefetch = 0 : i64, scratch_operands = 0 : i64, tpu.core_type = #tpu.core_type<tc>, window_params = [{transform_indices = @transform_0, window_bounds = array<i64: 8, 32>}, {pipeline_mode = #tpu.pipeline_mode<synchronous>, transform_indices = @transform_1, window_bounds = array<i64: 32, 32>}, {pipeline_mode = #tpu.pipeline_mode<synchronous>, transform_indices = @transform_2, window_bounds = array<i64: 1, 32>}, {transform_indices = @transform_3, window_bounds = array<i64: 8, 16>}, {transform_indices = @transform_4, window_bounds = array<i64: 8, 16>}]} {
    %c0 = arith.constant 0 : index
    %c0_0 = arith.constant 0 : index
    %0 = vector.load %arg1[%c0, %c0_0] : memref<8x32xf32, #tpu.memory_space<vmem>>, vector<8x32xf32>
    %c0_1 = arith.constant 0 : index
    %c0_2 = arith.constant 0 : index
    %1 = vector.load %arg2[%c0_1, %c0_2] : memref<32x32xf32, #tpu.memory_space<vmem>>, vector<32x32xf32>
    %cst = arith.constant dense<0.000000e+00> : vector<8x32xf32>
    %2 = tpu.matmul %0, %1, %cst {dimension_numbers = #tpu.dot_dimension_numbers<[1], [0], [0], [1], [0, 0, 1, 1], [], []>} : vector<8x32xf32>, vector<32x32xf32>, vector<8x32xf32> -> vector<8x32xf32>
    %c0_3 = arith.constant 0 : index
    %c0_4 = arith.constant 0 : index
    %3 = vector.load %arg3[%c0_3, %c0_4] : memref<1x32xf32, #tpu.memory_space<vmem>>, vector<1x32xf32>
    %4 = vector.broadcast %3 : vector<1x32xf32> to vector<8x32xf32>
    %5 = arith.addf %2, %4 : vector<8x32xf32>
    %6 = vector.extract_strided_slice %5 {offsets = [0, 0], sizes = [8, 16], strides = [1, 1]} : vector<8x32xf32> to vector<8x16xf32>
    %c0_5 = arith.constant 0 : index
    %c0_6 = arith.constant 0 : index
    %7 = vector.load %arg4[%c0_5, %c0_6] : memref<8x16xf32, #tpu.memory_space<vmem>>, vector<8x16xf32>
    tpu.vector_store %arg4[%c0_5, %c0_6], %6 {strides = array<i32>} : memref<8x16xf32, #tpu.memory_space<vmem>>, vector<8x16xf32>,
    %8 = vector.extract_strided_slice %5 {offsets = [0, 16], sizes = [8, 16], strides = [1, 1]} : vector<8x32xf32> to vector<8x16xf32>
    %c0_7 = arith.constant 0 : index
    %c0_8 = arith.constant 0 : index
    %9 = vector.load %arg5[%c0_7, %c0_8] : memref<8x16xf32, #tpu.memory_space<vmem>>, vector<8x16xf32>
    tpu.vector_store %arg5[%c0_7, %c0_8], %8 {strides = array<i32>} : memref<8x16xf32, #tpu.memory_space<vmem>>, vector<8x16xf32>,
    return
  }
  func.func @transform_0(%arg0: i32) -> (i32, i32) {
    %c0_i32 = arith.constant 0 : i32
    %c0_i32_0 = arith.constant 0 : i32
    return %arg0, %c0_i32 : i32, i32
  }
  func.func @transform_1(%arg0: i32) -> (i32, i32) {
    %c0_i32 = arith.constant 0 : i32
    %c0_i32_0 = arith.constant 0 : i32
    %c0_i32_1 = arith.constant 0 : i32
    return %c0_i32, %c0_i32_0 : i32, i32
  }
  func.func @transform_2(%arg0: i32) -> (i32, i32) {
    %c0_i32 = arith.constant 0 : i32
    %c0_i32_0 = arith.constant 0 : i32
    %c0_i32_1 = arith.constant 0 : i32
    return %c0_i32, %c0_i32_0 : i32, i32
  }
  func.func @transform_3(%arg0: i32) -> (i32, i32) {
    %c0_i32 = arith.constant 0 : i32
    %c0_i32_0 = arith.constant 0 : i32
    return %arg0, %c0_i32 : i32, i32
  }
  func.func @transform_4(%arg0: i32) -> (i32, i32) {
    %c0_i32 = arith.constant 0 : i32
    %c0_i32_0 = arith.constant 0 : i32
    return %arg0, %c0_i32 : i32, i32
  }
}

</mosaic_0001>

<llo_original>
// kernel: tpu_custom_call.1
$region0: #{tpu_custom_call.1}
  #allocation0 [shape = 'u32[]', space=smem, size = 0x4, offset = 0x4, fixed_abs, tag = 'smem constant byte address 0x4 - core index']
  #allocation1 [shape = 'u32[72,128]{1,0:T(1,128)}', space=vmem, size = 0x9000, scoped, tag = 'internal scratch']
  %s0 = inlined_call_operand.hbm [shape: f32[8,32], index: 0, kind: input, shape index: {}]
  %s1 = inlined_call_operand.hbm [shape: f32[32,32], index: 1, kind: input, shape index: {}]
  %s2 = inlined_call_operand.vmem [shape: f32[1,32], index: 2, kind: input, shape index: {}]
  %s3 = inlined_call_operand.hbm [shape: f32[8,16], index: 3, kind: output, shape index: {0}]
  %s4 = inlined_call_operand.hbm [shape: f32[8,16], index: 4, kind: output, shape index: {1}]
  %5 = xla_tuple %s3, %s4
  %s6 = sld [smem:[#allocation0]]
  $region38: #{tpu_custom_call.1} parent=0
    _
  %s8 = ssub.s32 1, %s6
  %s9 = scalar_select 0, %s8, %s6
  $region1: #{tpu_custom_call.1} parent=0
    #allocation2 [shape = 'u8[4096]{0}', space=vmem, size = 0x1000, scoped, tag = 'input window, operand 0, single buffered']
    #allocation3 [shape = 's32[1]{0}', space=sflag, size = 0x4, scoped, tag = 'scoped memory for tpu_custom_call.1']
    #allocation4 [shape = 's32[1]{0}', space=sflag, size = 0x4, scoped, tag = 'scoped memory for tpu_custom_call.1']
    #allocation5 [shape = 'u8[16384]{0}', space=vmem, size = 0x4000, scoped, tag = 'input window, operand 1, single buffered']
    #allocation6 [shape = 's32[1]{0}', space=sflag, size = 0x4, scoped, tag = 'scoped memory for tpu_custom_call.1']
    #allocation7 [shape = 'u8[4096]{0}', space=vmem, size = 0x1000, scoped, tag = 'output window, operand 0, single buffered']
    #allocation8 [shape = 'u8[4096]{0}', space=vmem, size = 0x1000, scoped, tag = 'output window, operand 1, single buffered']
    #allocation9 [shape = 's32[1]{0}', space=sflag, size = 0x4, scoped, tag = 'scoped memory for tpu_custom_call.1']
    %10 = vsyncpa [#allocation3], 0
    %11 = vsyncpa [#allocation6], 0
    %12 = vsyncpa [#allocation4], 0
    %13 = vsyncpa [#allocation9], 0
    // Predicated region
    $region2: #{tpu_custom_call.1} parent=1 // pred_check
      _
    $region3: #{tpu_custom_call.1} parent=1 // pred_check_branch
      %15 = sbr.rel (0) target = $region5
    $region4: #{tpu_custom_call.1} parent=1 // pred_region
      %17 = vsyncadd [#allocation3], 0
      %s19 = sshll.u32 %s0, 4
      %s20 = int_to_ptr.hbm [resolvable:$true] %s19
      %s21 = sshll.u32 [#allocation2], 4
      %s22 = int_to_ptr.vmem [resolvable:$true] %s21
      %24 = dma.hbm_to_vmem [thread:$0]  %s20, 128, %s22, [#allocation3]
    $region5: #{tpu_custom_call.1} parent=1 // pred_fallthru
      _
    // Predicated region
    $region6: #{tpu_custom_call.1} parent=1 // pred_check
      _
    $region7: #{tpu_custom_call.1} parent=1 // pred_check_branch
      %26 = sbr.rel (0) target = $region9
    $region8: #{tpu_custom_call.1} parent=1 // pred_region
      %28 = vsyncadd [#allocation6], 0
      %s29 = sshll.u32 %s1, 4
      %s30 = int_to_ptr.hbm [resolvable:$true] %s29
      %s31 = sshll.u32 [#allocation5], 4
      %s32 = int_to_ptr.vmem [resolvable:$true] %s31
      %37 = dma.hbm_to_vmem [thread:$0]  %s30, 512, %s32, [#allocation6], 128, 128, 8
    $region9: #{tpu_custom_call.1} parent=1 // pred_fallthru
      _
    // Predicated region
    $region10: #{tpu_custom_call.1} parent=1 // pred_check
      _
    $region11: #{tpu_custom_call.1} parent=1 // pred_check_branch
      %39 = sbr.rel (0) target = $region13
    $region12: #{tpu_custom_call.1} parent=1 // pred_region
      _
    $region13: #{tpu_custom_call.1} parent=1 // pred_fallthru
      _
    // Predicated region
    $region14: #{tpu_custom_call.1} parent=1 // pred_check
      _
    $region15: #{tpu_custom_call.1} parent=1 // pred_check_branch
      %41 = sbr.rel (0) target = $region17
    $region16: #{tpu_custom_call.1} parent=1 // pred_region
      %43 = dma.done [#allocation3], 128
    $region17: #{tpu_custom_call.1} parent=1 // pred_fallthru
      _
    // Predicated region
    $region18: #{tpu_custom_call.1} parent=1 // pred_check
      _
    $region19: #{tpu_custom_call.1} parent=1 // pred_check_branch
      %45 = sbr.rel (0) target = $region21
    $region20: #{tpu_custom_call.1} parent=1 // pred_region
      %47 = dma.done [#allocation6], 512
    $region21: #{tpu_custom_call.1} parent=1 // pred_fallthru
      _
    %v48 = vld [vmem:[#allocation2] sm:$0xff]
    %v49 = vld [vmem:[#allocation5] sm:$0xff]
    %v50 = vld [vmem:[#allocation5 + $0x8] sm:$0xff]
    %v51 = vld [vmem:[#allocation5 + $0x10] sm:$0xff]
    %v52 = vld [vmem:[#allocation5 + $0x18] sm:$0xff]
    %v53 = vld [vmem:[%s2] sm:$0x1]
    %v55 = vperm.slane %v53, 0
    %vm57 = vcmask 261120
    %v59 = vsel %vm57, %v48, 0
    %61 = vmatpush.msra.mxu0 0.0
    %62 = vmatpush.msra.mxu0 0.0
    %63 = vmatpush.msra.mxu0 0.0
    %64 = vmatpush.msra.mxu0 0.0
    %65 = vmatpush.msra.mxu0 0.0
    %66 = vmatpush.msra.mxu0 0.0
    %67 = vmatpush.msra.mxu0 0.0
    %68 = vmatpush.msra.mxu0 0.0
    %69 = vmatpush.msra.mxu0 0.0
    %70 = vmatpush.msra.mxu0 0.0
    %71 = vmatpush.msra.mxu0 0.0
    %72 = vmatpush.msra.mxu0 0.0
    %73 = vmatpush.msra.mxu0 %v52
    %74 = vmatpush.msra.mxu0 %v51
    %75 = vmatpush.msra.mxu0 %v50
    %76 = vmatpush.msra.mxu0 %v49
    %77 = vmatmul.f32.gmra.mxu0 %v59
    %v78 = vpop.f32.mrf.mxu0
    %v79 = vadd.f32 %v55, %v78
    %80 = vdwg.mxu0
    %vm81 = vcmask 130048
    %82 = vst.msk [vmem:[#allocation7] sm:$0xff] %vm81, %v79
    %84 = vrot.lane.b32.xlu0 %v79, 112
    %v85 = vpop.permute.xlu0 %84
    %87 = vst.msk [vmem:[#allocation8] sm:$0xff] %vm81, %v85
    // Predicated region
    $region22: #{tpu_custom_call.1} parent=1 // pred_check
      _
    $region23: #{tpu_custom_call.1} parent=1 // pred_check_branch
      %89 = sbr.rel (0) target = $region25
    $region24: #{tpu_custom_call.1} parent=1 // pred_region
      %91 = vsyncadd [#allocation4], 0
      %s93 = sshll.u32 [#allocation7], 4
      %s94 = int_to_ptr.vmem [resolvable:$true] %s93
      %s95 = sshll.u32 %s3, 4
      %s96 = int_to_ptr.hbm [resolvable:$true] %s95
      %98 = dma.vmem_to_hbm [thread:$0]  %s94, 128, %s96, [#allocation4]
    $region25: #{tpu_custom_call.1} parent=1 // pred_fallthru
      _
    // Predicated region
    $region26: #{tpu_custom_call.1} parent=1 // pred_check
      _
    $region27: #{tpu_custom_call.1} parent=1 // pred_check_branch
      %100 = sbr.rel (0) target = $region29
    $region28: #{tpu_custom_call.1} parent=1 // pred_region
      %102 = vsyncadd [#allocation9], 0
      %s104 = sshll.u32 [#allocation8], 4
      %s105 = int_to_ptr.vmem [resolvable:$true] %s104
      %s106 = sshll.u32 %s4, 4
      %s107 = int_to_ptr.hbm [resolvable:$true] %s106
      %109 = dma.vmem_to_hbm [thread:$0]  %s105, 128, %s107, [#allocation9]
    $region29: #{tpu_custom_call.1} parent=1 // pred_fallthru
      _
    // Predicated region
    $region30: #{tpu_custom_call.1} parent=1 // pred_check
      _
    $region31: #{tpu_custom_call.1} parent=1 // pred_check_branch
      %111 = sbr.rel (0) target = $region33
    $region32: #{tpu_custom_call.1} parent=1 // pred_region
      %113 = dma.done [#allocation4], 128
    $region33: #{tpu_custom_call.1} parent=1 // pred_fallthru
      _
    // Predicated region
    $region34: #{tpu_custom_call.1} parent=1 // pred_check
      _
    $region35: #{tpu_custom_call.1} parent=1 // pred_check_branch
      %115 = sbr.rel (0) target = $region37
    $region36: #{tpu_custom_call.1} parent=1 // pred_region
      %117 = dma.done [#allocation9], 128
    $region37: #{tpu_custom_call.1} parent=1 // pred_fallthru
      _
    %118 = vsyncpa [#allocation3], 1
    %119 = vsyncpa [#allocation6], 1
    %120 = vsyncpa [#allocation4], 1
    %121 = vsyncpa [#allocation9], 1

</llo_original>
